<compile_context>
chip_gen: v5e
topology: v5e:2x2
jax: 0.10.0
libtpu: 0.0.40
codegen_flags: <defaults>
</compile_context>

<pallas_src>
import functools

import jax
import jax.numpy as jnp
from jax import lax
from jax.experimental import pallas as pl
from jax.experimental.pallas import tpu as pltpu

_LANES = 128
_SUBLANES = 8
_SUB_ROWS = 1024          # in-kernel compute sub-chunk (bounds VMEM temporaries)
_NUM_PARTITIONS = 2       # megacore split for v7x; harmless loop on 1-TC chips
_SCALE = 1.0 / (-81.0 * 2.0)


def _tile_budget():
    """(max_tile_rows, vmem_limit_bytes) per TPU generation."""
    try:
        kind = jax.devices()[0].device_kind.lower()
    except Exception:
        kind = ""
    if ("v6" in kind) or ("v7" in kind) or ("7x" in kind):
        # 8192x128 f32 = 4 MiB/buffer; 2 inputs x 2 pipeline buffers = 16 MiB.
        # Raise the scoped-VMEM cap for headroom (physical: 128 / 64 MiB).
        return 8192, 48 * 1024 * 1024
    # v5-class (16 MiB scoped-VMEM default) and unknown chips: conservative.
    return 4096, None


def _pick_tile_rows(rows, num_parts, max_rows):
    """Largest multiple-of-8 tile <= max_rows, preferring even tilings."""
    if rows % num_parts == 0:
        rpp = rows // num_parts
        if rpp % _SUBLANES == 0:
            if rpp <= max_rows:
                return rpp
            # Largest multiple-of-8 divisor of rpp that fits the VMEM budget.
            k0 = -(-rpp // max_rows)
            for k in range(k0, k0 + 256):
                if rpp % k == 0 and (rpp // k) % _SUBLANES == 0:
                    if rpp // k >= max_rows // 2:
                        return rpp // k
                    break
    # Ragged fallback: boundary tile / clamped steps are masked in-kernel.
    return max(_SUBLANES,
               min(max_rows, (-(-rows // num_parts)) // _SUBLANES * _SUBLANES))


def _bell_sum_exp_kernel(pred_ref, label_ref, out_ref, *, valid_rows, tile_rows,
                         first_masked_tile, needs_mask, sub_rows):
    k = pl.program_id(1)

    @pl.when(k == 0)
    def _init():
        out_ref[...] = jnp.zeros_like(out_ref)

    # Logical tile index (partition-major).  Clamped redundant steps map past
    # the last physical tile and get fully masked below.
    tile_idx = pl.program_id(0) * pl.num_programs(1) + k

    def accumulate(masked):
        # Compute in sub-chunks so elementwise temporaries stay small; the
        # (tile_rows, 128) block is still a single pipelined DMA per grid step.
        for start in range(0, tile_rows, sub_rows):
            size = min(sub_rows, tile_rows - start)
            pred = pred_ref[start:start + size, :].astype(jnp.float32)
            label = label_ref[start:start + size, :].astype(jnp.float32)
            diff = pred - label
            e = jnp.exp((diff * diff) * _SCALE)          # EUP transcendental
            if masked:
                row_ids = (tile_idx * tile_rows + start
                           + lax.broadcasted_iota(jnp.int32, (size, _LANES), 0))
                e = jnp.where(row_ids < valid_rows, e, 0.0)
            # Pure VPU accumulation into the resident (8, 128) output block.
            out_ref[...] += e.reshape(-1, _SUBLANES, _LANES).sum(axis=0)

    if not needs_mask:
        accumulate(masked=False)
    elif first_masked_tile <= 0:
        accumulate(masked=True)
    else:
        @pl.when(tile_idx < first_masked_tile)
        def _bulk():
            accumulate(masked=False)

        @pl.when(tile_idx >= first_masked_tile)
        def _boundary():
            accumulate(masked=True)


def _bell_loss_tail(pred_tail, label_tail):
    d = pred_tail.astype(jnp.float32) - label_tail.astype(jnp.float32)
    return jnp.sum((1.0 - jnp.exp((d * d) * _SCALE)) * 300.0)


def belling_loss(pred, label):
    """mean((1 - exp((pred - label)^2 / -162)) * 300) via a Pallas TPU kernel.

    HBM-bound: pass bf16 pred/label when available to halve bytes streamed
    (the kernel upcasts to f32 in-register).
    """
    assert pred.shape == label.shape, "pred/label must have the same shape"
    numel = pred.size
    if numel == 0:
        return jnp.float32(0.0) / jnp.float32(0.0)   # matches torch 0/0 -> nan

    p_flat = jnp.ravel(pred)
    l_flat = jnp.ravel(label)

    # Split off the <128-element ragged tail (plain jnp, negligible) instead of
    # padding the full arrays (a hidden full HBM copy).
    main = (numel // _LANES) * _LANES
    tail_sum = None
    if main != numel:
        tail_sum = _bell_loss_tail(p_flat[main:], l_flat[main:])
        if main == 0:
            return tail_sum / jnp.float32(numel)
        p_flat = p_flat[:main]
        l_flat = l_flat[:main]

    valid_rows = main // _LANES
    p2 = p_flat.reshape(valid_rows, _LANES)     # bitcast reshape: no copy
    l2 = l_flat.reshape(valid_rows, _LANES)

    rows_alloc = valid_rows
    if rows_alloc < _SUBLANES:
        # Tiny input (<1024 elements): pad the slab to 8 rows (<4 KiB copy).
        pad = _SUBLANES - rows_alloc
        p2 = jnp.pad(p2, ((0, pad), (0, 0)))
        l2 = jnp.pad(l2, ((0, pad), (0, 0)))
        rows_alloc = _SUBLANES

    max_rows, vmem_limit = _tile_budget()
    num_parts = _NUM_PARTITIONS if rows_alloc >= _SUBLANES * _NUM_PARTITIONS else 1
    tile_rows = _pick_tile_rows(rows_alloc, num_parts, max_rows)
    num_tiles = pl.cdiv(rows_alloc, tile_rows)
    k_steps = pl.cdiv(num_tiles, num_parts)
    max_tile = num_tiles - 1

    partial_tile = (valid_rows % tile_rows) != 0
    clamped = (num_parts * k_steps) != num_tiles
    needs_mask = partial_tile or clamped
    first_masked = (valid_rows // tile_rows) if partial_tile else num_tiles

    if clamped:
        def in_map(p, k):
            return (jnp.minimum(p * k_steps + k, max_tile), 0)
    else:
        def in_map(p, k):
            return (p * k_steps + k, 0)

    kernel = functools.partial(
        _bell_sum_exp_kernel, valid_rows=valid_rows, tile_rows=tile_rows,
        first_masked_tile=first_masked, needs_mask=needs_mask,
        sub_rows=_SUB_ROWS)

    itemsize = jnp.dtype(pred.dtype).itemsize
    n_elems = rows_alloc * _LANES
    cost = pl.CostEstimate(
        flops=4 * n_elems,
        transcendentals=n_elems,
        bytes_accessed=2 * n_elems * itemsize + num_parts * _SUBLANES * _LANES * 4,
    )

    partials = pl.pallas_call(
        kernel,
        out_shape=jax.ShapeDtypeStruct((num_parts, _SUBLANES, _LANES),
                                       jnp.float32),
        grid_spec=pltpu.PrefetchScalarGridSpec(
            num_scalar_prefetch=0,
            grid=(num_parts, k_steps),
            in_specs=[
                pl.BlockSpec((tile_rows, _LANES), in_map),
                pl.BlockSpec((tile_rows, _LANES), in_map),
            ],
            # Leading dim squeezed; block index constant across k -> resident
            # per-partition accumulator.
            out_specs=pl.BlockSpec((None, _SUBLANES, _LANES),
                                   lambda p, k: (p, 0, 0)),
        ),
        compiler_params=pltpu.CompilerParams(
            dimension_semantics=("parallel", "arbitrary"),
            vmem_limit_bytes=vmem_limit,
        ),
        cost_estimate=cost,
    )(p2, l2)

    # loss = 300 * (1 - e)  =>  sum(loss) = 300 * (count - sum(e)).
    # The kernel sums e over exactly `valid_rows * 128` unmasked elements
    # (tiny zero-pad rows and OOB/clamped rows are masked to 0).
    sum_exp = jnp.sum(partials)
    total = 300.0 * (jnp.float32(valid_rows * _LANES) - sum_exp)
    if tail_sum is not None:
        total = total + tail_sum
    return total / jnp.float32(numel)


def _reference(pred, label):
    p = pred.astype(jnp.float32)
    l = label.astype(jnp.float32)
    loss = (1.0 - jnp.exp(jnp.square(p - l) / -162.0)) * 300.0
    return jnp.sum(loss) / loss.size


if __name__ == "__main__":
    key = jax.random.PRNGKey(0)
    k1, k2, k3, k4, k5, k6 = jax.random.split(key, 6)

    # Primary small NCHW-like pair (zero-copy aligned path, 2-way partition).
    pred = jax.random.normal(k1, (2, 4, 16, 16), jnp.float32) * 3.0
    label = jax.random.normal(k2, (2, 4, 16, 16), jnp.float32) * 3.0
    out = jax.block_until_ready(belling_loss(pred, label))
    ref = _reference(pred, label)
    assert jnp.allclose(out, ref, rtol=1e-4, atol=1e-4), (out, ref)

    # Partial boundary tile + clamped redundant step (gated mask path).
    pred2 = jax.random.normal(k3, (7, 300, 128), jnp.float32) * 3.0
    label2 = jax.random.normal(k4, (7, 300, 128), jnp.float32) * 3.0
    out2 = jax.block_until_ready(belling_loss(pred2, label2))
    ref2 = _reference(pred2, label2)
    assert jnp.allclose(out2, ref2, rtol=1e-4, atol=1e-4), (out2, ref2)

    # Ragged numel (wrapper tail path) + tiny-row pad path.
    pred3 = jax.random.normal(k5, (5, 7, 13), jnp.float32) * 3.0
    label3 = jax.random.normal(k6, (5, 7, 13), jnp.float32) * 3.0
    out3 = jax.block_until_ready(belling_loss(pred3, label3))
    ref3 = _reference(pred3, label3)
    assert jnp.allclose(out3, ref3, rtol=1e-4, atol=1e-4), (out3, ref3)

    print("KERNEL_OK")
</pallas_src>

<mosaic_0001>
module attributes {stable_mosaic.version = 11 : i64} {
  func.func @_bell_sum_exp_kernel(%arg0: i32, %arg1: i32, %arg2: memref<8x128xf32, #tpu.memory_space<vmem>>, %arg3: memref<8x128xf32, #tpu.memory_space<vmem>>, %arg4: memref<1x8x128xf32, #tpu.memory_space<vmem>>) attributes {dimension_semantics = [#tpu.dimension_semantics<parallel>, #tpu.dimension_semantics<arbitrary>], iteration_bounds = array<i64: 2, 1>, scalar_prefetch = 0 : i64, scratch_operands = 0 : i64, tpu.core_type = #tpu.core_type<tc>, window_params = [{transform_indices = @transform_0, window_bounds = array<i64: 8, 128>}, {transform_indices = @transform_1, window_bounds = array<i64: 8, 128>}, {transform_indices = @transform_2, window_bounds = array<i64: 1, 8, 128>}]} {
    %c0_i32 = arith.constant 0 : i32
    %0 = arith.cmpi eq, %arg1, %c0_i32 : i32
    %1 = arith.extui %0 : i1 to i32
    %c0_i32_0 = arith.constant 0 : i32
    %2 = arith.cmpi ne, %1, %c0_i32_0 : i32
    scf.if %2 {
      %cst_11 = arith.constant 0.000000e+00 : f32
      %18 = vector.broadcast %cst_11 : f32 to vector<8x128xf32>
      %c0_12 = arith.constant 0 : index
      %c0_13 = arith.constant 0 : index
      %c0_14 = arith.constant 0 : index
      %19 = vector.load %arg4[%c0_12, %c0_13, %c0_14] : memref<1x8x128xf32, #tpu.memory_space<vmem>>, vector<1x8x128xf32>
      %20 = vector.shape_cast %19 : vector<1x8x128xf32> to vector<8x128xf32>
      %21 = vector.shape_cast %18 : vector<8x128xf32> to vector<1x8x128xf32>
      tpu.vector_store %arg4[%c0_12, %c0_13, %c0_14], %21 {strides = array<i32>} : memref<1x8x128xf32, #tpu.memory_space<vmem>>, vector<1x8x128xf32>,
    } else {
    }
    %c0 = arith.constant 0 : index
    %c0_1 = arith.constant 0 : index
    %3 = vector.load %arg2[%c0, %c0_1] : memref<8x128xf32, #tpu.memory_space<vmem>>, vector<8x128xf32>
    %c0_2 = arith.constant 0 : index
    %c0_3 = arith.constant 0 : index
    %4 = vector.load %arg3[%c0_2, %c0_3] : memref<8x128xf32, #tpu.memory_space<vmem>>, vector<8x128xf32>
    %5 = arith.subf %3, %4 : vector<8x128xf32>
    %6 = arith.mulf %5, %5 : vector<8x128xf32>
    %cst = arith.constant -0.00617283955 : f32
    %7 = vector.broadcast %cst : f32 to vector<8x128xf32>
    %8 = arith.mulf %6, %7 : vector<8x128xf32>
    %9 = math.exp %8 : vector<8x128xf32>
    %c0_4 = arith.constant 0 : index
    %c0_5 = arith.constant 0 : index
    %c0_6 = arith.constant 0 : index
    %10 = vector.load %arg4[%c0_4, %c0_5, %c0_6] : memref<1x8x128xf32, #tpu.memory_space<vmem>>, vector<1x8x128xf32>
    %11 = vector.shape_cast %10 : vector<1x8x128xf32> to vector<8x128xf32>
    %12 = vector.shape_cast %9 : vector<8x128xf32> to vector<1x8x128xf32>
    %cst_7 = arith.constant dense<0.000000e+00> : vector<8x128xf32>
    %13 = vector.multi_reduction <add>, %12, %cst_7 [0] : vector<1x8x128xf32> to vector<8x128xf32>
    %14 = arith.addf %11, %13 : vector<8x128xf32>
    %c0_8 = arith.constant 0 : index
    %c0_9 = arith.constant 0 : index
    %c0_10 = arith.constant 0 : index
    %15 = vector.load %arg4[%c0_8, %c0_9, %c0_10] : memref<1x8x128xf32, #tpu.memory_space<vmem>>, vector<1x8x128xf32>
    %16 = vector.shape_cast %15 : vector<1x8x128xf32> to vector<8x128xf32>
    %17 = vector.shape_cast %14 : vector<8x128xf32> to vector<1x8x128xf32>
    tpu.vector_store %arg4[%c0_8, %c0_9, %c0_10], %17 {strides = array<i32>} : memref<1x8x128xf32, #tpu.memory_space<vmem>>, vector<1x8x128xf32>,
    return
  }
  func.func @transform_0(%arg0: i32, %arg1: i32) -> (i32, i32) {
    %c1_i32 = arith.constant 1 : i32
    %0 = arith.muli %arg0, %c1_i32 : i32
    %1 = arith.addi %0, %arg1 : i32
    %c0_i32 = arith.constant 0 : i32
    %c0_i32_0 = arith.constant 0 : i32
    return %1, %c0_i32 : i32, i32
  }
  func.func @transform_1(%arg0: i32, %arg1: i32) -> (i32, i32) {
    %c1_i32 = arith.constant 1 : i32
    %0 = arith.muli %arg0, %c1_i32 : i32
    %1 = arith.addi %0, %arg1 : i32
    %c0_i32 = arith.constant 0 : i32
    %c0_i32_0 = arith.constant 0 : i32
    return %1, %c0_i32 : i32, i32
  }
  func.func @transform_2(%arg0: i32, %arg1: i32) -> (i32, i32, i32) {
    %c0_i32 = arith.constant 0 : i32
    %c0_i32_0 = arith.constant 0 : i32
    %c0_i32_1 = arith.constant 0 : i32
    return %arg0, %c0_i32, %c0_i32_0 : i32, i32, i32
  }
}

</mosaic_0001>

<llo_original>
// kernel: tpu_custom_call.1
$region0: #{tpu_custom_call.1}
  #allocation0 [shape = 'u32[]', space=smem, size = 0x4, offset = 0x4, fixed_abs, tag = 'smem constant byte address 0x4 - core index']
  #allocation1 [shape = 'u32[72,128]{1,0:T(1,128)}', space=vmem, size = 0x9000, scoped, tag = 'internal scratch']
  %s0 = inlined_call_operand.hbm [shape: f32[16,128], index: 0, kind: input, shape index: {}]
  %s1 = inlined_call_operand.hbm [shape: f32[16,128], index: 1, kind: input, shape index: {}]
  %s2 = inlined_call_operand.hbm [shape: f32[2,8,128], index: 2, kind: output, shape index: {}]
  %s3 = sld [smem:[#allocation0]]
  $region53: #{tpu_custom_call.1} parent=0
    _
  %s5 = ssub.s32 1, %s3
  %s6 = scalar_select 0, %s5, %s3
  $region1: #{tpu_custom_call.1} parent=0
    #allocation2 [shape = 'u8[8192]{0}', space=vmem, size = 0x2000, scoped, tag = 'input window, operand 0']
    #allocation3 [shape = 's32[2]{0}', space=sflag, size = 0x8, scoped, tag = 'scoped memory for tpu_custom_call.1']
    #allocation4 [shape = 's32[2]{0}', space=sflag, size = 0x8, scoped, tag = 'scoped memory for tpu_custom_call.1']
    #allocation5 [shape = 'u8[8192]{0}', space=vmem, size = 0x2000, scoped, tag = 'input window, operand 1']
    #allocation6 [shape = 's32[2]{0}', space=sflag, size = 0x8, scoped, tag = 'scoped memory for tpu_custom_call.1']
    #allocation7 [shape = 'u8[8192]{0}', space=vmem, size = 0x2000, scoped, tag = 'output window, operand 0']
    %7 = vsyncpa [#allocation3], 0
    %s8 = scalar_lea.sflag [#allocation3], 1
    %9 = vsyncpa %s8, 0
    %10 = vsyncpa [#allocation6], 0
    %s11 = scalar_lea.sflag [#allocation6], 1
    %12 = vsyncpa %s11, 0
    %13 = vsyncpa [#allocation4], 0
    %s14 = scalar_lea.sflag [#allocation4], 1
    %15 = vsyncpa %s14, 0
    loop: start=0, step=1, limit=4
    $region2: #{tpu_custom_call.1} parent=1 // loop_pre_header
      _
    $region3: #{tpu_custom_call.1} parent=1 // loop_header
      %s17 = sphi 0, %s21
      %p18 = scmp.ge.s32.totalorder %s17, 4
      %s24 = sphi 0, %s36
      %s25 = sphi 0, %s32
      %s26 = sphi 0, %s24
      %s27 = sphi 0, %s25
      %s28 = sphi 0, %s26
      %s29 = sphi 0, %s27
      %s41 = sphi 0, %s43
      %s44 = sphi 0, %s41
      %s45 = sphi 0, %s44
      %s61 = sphi 0, %s45
      %s69 = sphi 0, %s71
      %s72 = sphi 0, %s69
      %s73 = sphi 0, %s72
      %s89 = sphi 0, %s73
      %s95 = sphi 0, %s97
      %s98 = sphi 0, %s95
      %s99 = sphi 0, %s98
      %s115 = sphi 0, %s99
    $region4: #{tpu_custom_call.1} parent=1 // loop_header_branch
      %20 = sbr.rel (%p18) target = $region8
    $region5: #{tpu_custom_call.1} parent=1 // loop_body
      %s22 = ssub.s32 %s17, 1
      %s23 = ssub.s32 %s17, 2
      %s30 = sadd.s32 1, %s25
      %p31 = scmp.ge.s32.totalorder %s30, 1
      %s32 = scalar_select %p31, 0, %s30
      %s33 = sadd.s32 1, %s24
      %s34 = scalar_select %p31, %s33, %s24
      %p35 = scmp.ge.s32.totalorder %s34, 2
      %s36 = scalar_select %p35, 0, %s34
      %s37 = sadd.s32 %s24, %s25
      %s38 = sadd.s32 %s36, %s32
      %s39 = ssub.s32 %s37, %s38
      %p40 = scmp.eq.s32.totalorder %s39, 0
      %s42 = sadd.s32 %s41, 1
      %s43 = scalar_select %p40, %s41, %s42
      %p46 = pneg %p40
      %p47 = scmp.eq.s32.totalorder %s17, 1
      %p48 = por %p46, %p47
      %p49 = scmp.ne.s32.totalorder %s41, %s44
      %p50 = scmp.eq.s32.totalorder %s17, 0
      %p51 = por %p49, %p50
      %p52 = scmp.ne.s32.totalorder %s41, %s44
      %p53 = scmp.eq.s32.totalorder %s22, 1
      %p54 = por %p52, %p53
      %p55 = scmp.ne.s32.totalorder %s44, %s45
      %p56 = scmp.eq.s32.totalorder %s22, 0
      %p57 = por %p55, %p56
      %p58 = scmp.ne.s32.totalorder %s44, %s45
      %p59 = scmp.eq.s32.totalorder %s23, 1
      %p60 = por %p58, %p59
      %p62 = scmp.ne.s32.totalorder %s45, %s61
      %p63 = scmp.eq.s32.totalorder %s23, 0
      %p64 = por %p62, %p63
      %s65 = sadd.s32 %s24, %s25
      %s66 = sadd.s32 %s36, %s32
      %s67 = ssub.s32 %s65, %s66
      %p68 = scmp.eq.s32.totalorder %s67, 0
      %s70 = sadd.s32 %s69, 1
      %s71 = scalar_select %p68, %s69, %s70
      %p74 = pneg %p68
      %p75 = scmp.eq.s32.totalorder %s17, 1
      %p76 = por %p74, %p75
      %p77 = scmp.ne.s32.totalorder %s69, %s72
      %p78 = scmp.eq.s32.totalorder %s17, 0
      %p79 = por %p77, %p78
      %p80 = scmp.ne.s32.totalorder %s69, %s72
      %p81 = scmp.eq.s32.totalorder %s22, 1
      %p82 = por %p80, %p81
      %p83 = scmp.ne.s32.totalorder %s72, %s73
      %p84 = scmp.eq.s32.totalorder %s22, 0
      %p85 = por %p83, %p84
      %p86 = scmp.ne.s32.totalorder %s72, %s73
      %p87 = scmp.eq.s32.totalorder %s23, 1
      %p88 = por %p86, %p87
      %p90 = scmp.ne.s32.totalorder %s73, %s89
      %p91 = scmp.eq.s32.totalorder %s23, 0
      %p92 = por %p90, %p91
      %s93 = ssub.s32 %s24, %s36
      %p94 = scmp.eq.s32.totalorder %s93, 0
      %s96 = sadd.s32 %s95, 1
      %s97 = scalar_select %p94, %s95, %s96
      %p100 = pneg %p94
      %p101 = scmp.eq.s32.totalorder %s17, 1
      %p102 = por %p100, %p101
      %p103 = scmp.ne.s32.totalorder %s95, %s98
      %p104 = scmp.eq.s32.totalorder %s17, 0
      %p105 = por %p103, %p104
      %p106 = scmp.ne.s32.totalorder %s95, %s98
      %p107 = scmp.eq.s32.totalorder %s22, 1
      %p108 = por %p106, %p107
      %p109 = scmp.ne.s32.totalorder %s98, %s99
      %p110 = scmp.eq.s32.totalorder %s22, 0
      %p111 = por %p109, %p110
      %p112 = scmp.ne.s32.totalorder %s98, %s99
      %p113 = scmp.eq.s32.totalorder %s23, 1
      %p114 = por %p112, %p113
      %p116 = scmp.ne.s32.totalorder %s99, %s115
      %p117 = scmp.eq.s32.totalorder %s23, 0
      %p118 = por %p116, %p117
      %p119 = scmp.le.s32.totalorder 1, %s17
      %p120 = scmp.lt.s32.totalorder %s17, 3
      %p121 = pnand %p119, %p120
      %p122 = pneg %p121
      // Predicated region
      $region9: #{tpu_custom_call.1} parent=5 // pred_check
        _
      $region10: #{tpu_custom_call.1} parent=5 // pred_check_branch
        %124 = sbr.rel (%p121) target = $region12
      $region11: #{tpu_custom_call.1} parent=5 // pred_region
        %s125 = ssub.s32 %s17, 1
      $region12: #{tpu_custom_call.1} parent=5 // pred_fallthru
        _
      %p126 = scmp.lt.s32.totalorder %s17, 2
      // Predicated region
      $region13: #{tpu_custom_call.1} parent=5 // pred_check
        %p127 = pneg %p126
      $region14: #{tpu_custom_call.1} parent=5 // pred_check_branch
        %129 = sbr.rel (%p127) target = $region16
      $region15: #{tpu_custom_call.1} parent=5 // pred_region
        // Predicated region
        $region17: #{tpu_custom_call.1} parent=15 // pred_check
          %p130 = pneg %p51
        $region18: #{tpu_custom_call.1} parent=15 // pred_check_branch
          %132 = sbr.rel (%p130) target = $region20
        $region19: #{tpu_custom_call.1} parent=15 // pred_region
          %s133 = sand.u32 %s41, 1
          %s134 = scalar_lea.sflag [#allocation3], %s133
          %s135 = sand.u32 %s41, 1
          %s136 = smul.addr %s135, 8
          %s137 = scalar_lea.vmem [#allocation2], %s136
          %s138 = sadd.s32 %s24, %s25
          %140 = vsyncadd %s134, 0
          %s141 = smul.addr %s138, 8
          %s142 = scalar_lea.hbm %s0, %s141
          %s144 = sshll.u32 %s142, 4
          %s145 = int_to_ptr.hbm [resolvable:$true] %s144
          %s146 = sshll.u32 %s137, 4
          %s147 = int_to_ptr.vmem [resolvable:$true] %s146
          %149 = dma.hbm_to_vmem [thread:$0]  %s145, 128, %s147, %s134
        $region20: #{tpu_custom_call.1} parent=15 // pred_fallthru
          _
        // Predicated region
        $region21: #{tpu_custom_call.1} parent=15 // pred_check
          %p150 = pneg %p79
        $region22: #{tpu_custom_call.1} parent=15 // pred_check_branch
          %152 = sbr.rel (%p150) target = $region24
        $region23: #{tpu_custom_call.1} parent=15 // pred_region
          %s153 = sand.u32 %s69, 1
          %s154 = scalar_lea.sflag [#allocation6], %s153
          %s155 = sand.u32 %s69, 1
          %s156 = smul.addr %s155, 8
          %s157 = scalar_lea.vmem [#allocation5], %s156
          %s158 = sadd.s32 %s24, %s25
          %160 = vsyncadd %s154, 0
          %s161 = smul.addr %s158, 8
          %s162 = scalar_lea.hbm %s1, %s161
          %s164 = sshll.u32 %s162, 4
          %s165 = int_to_ptr.hbm [resolvable:$true] %s164
          %s166 = sshll.u32 %s157, 4
          %s167 = int_to_ptr.vmem [resolvable:$true] %s166
          %169 = dma.hbm_to_vmem [thread:$0]  %s165, 128, %s167, %s154
        $region24: #{tpu_custom_call.1} parent=15 // pred_fallthru
          _
      $region16: #{tpu_custom_call.1} parent=5 // pred_fallthru
        _
      %p170 = scmp.le.s32.totalorder 1, %s17
      %p171 = scmp.lt.s32.totalorder %s17, 3
      %p172 = pnand %p170, %p171
      %p173 = pneg %p172
      // Predicated region
      $region25: #{tpu_custom_call.1} parent=5 // pred_check
        _
      $region26: #{tpu_custom_call.1} parent=5 // pred_check_branch
        %175 = sbr.rel (%p172) target = $region28
      $region27: #{tpu_custom_call.1} parent=5 // pred_region
        %s176 = ssub.s32 %s17, 1
        %s177 = sand.u32 %s44, 1
        %s178 = scalar_lea.sflag [#allocation3], %s177
        %s179 = sand.u32 %s44, 1
        %s180 = smul.addr %s179, 8
        %s181 = scalar_lea.vmem [#allocation2], %s180
        // Predicated region
        $region29: #{tpu_custom_call.1} parent=27 // pred_check
          %p182 = pneg %p57
        $region30: #{tpu_custom_call.1} parent=27 // pred_check_branch
          %184 = sbr.rel (%p182) target = $region32
        $region31: #{tpu_custom_call.1} parent=27 // pred_region
          %186 = dma.done %s178, 128
        $region32: #{tpu_custom_call.1} parent=27 // pred_fallthru
          _
        %s187 = sand.u32 %s72, 1
        %s188 = scalar_lea.sflag [#allocation6], %s187
        %s189 = sand.u32 %s72, 1
        %s190 = smul.addr %s189, 8
        %s191 = scalar_lea.vmem [#allocation5], %s190
        // Predicated region
        $region33: #{tpu_custom_call.1} parent=27 // pred_check
          %p192 = pneg %p85
        $region34: #{tpu_custom_call.1} parent=27 // pred_check_branch
          %194 = sbr.rel (%p192) target = $region36
        $region35: #{tpu_custom_call.1} parent=27 // pred_region
          %196 = dma.done %s188, 128
        $region36: #{tpu_custom_call.1} parent=27 // pred_fallthru
          _
        %s197 = sand.u32 %s44, 1
        %s198 = scalar_lea.sflag [#allocation3], %s197
        %s199 = sand.u32 %s44, 1
        %s200 = smul.addr %s199, 8
        %s201 = scalar_lea.vmem [#allocation2], %s200
        %p202 = pneg %p57
        %p203 = pneg %p54
        %s204 = sand.u32 %s72, 1
        %s205 = scalar_lea.sflag [#allocation6], %s204
        %s206 = sand.u32 %s72, 1
        %s207 = smul.addr %s206, 8
        %s208 = scalar_lea.vmem [#allocation5], %s207
        %p209 = pneg %p85
        %p210 = pneg %p82
        %p211 = pneg %p111
        %p212 = pneg %p108
        %s213 = sand.u32 %s98, 1
        %s214 = scalar_lea.sflag [#allocation4], %s213
        %s215 = sand.u32 %s98, 1
        %s216 = smul.addr %s215, 8
        %s217 = scalar_lea.vmem [#allocation7], %s216
        %s218 = sadd.s32 %s26, %s27
        %s219 = sadd.s32 %s26, %s27
        %p220 = scmp.eq.s32.totalorder %s27, 0
        // Predicated region
        $region37: #{tpu_custom_call.1} parent=27 // pred_check
          %p221 = pneg %p220
        $region38: #{tpu_custom_call.1} parent=27 // pred_check_branch
          %223 = sbr.rel (%p221) target = $region40
        $region39: #{tpu_custom_call.1} parent=27 // pred_region
          %224 = vst [vmem:[%s217] sm:$0xff] 0.0
        $region40: #{tpu_custom_call.1} parent=27 // pred_fallthru
          _
        %v225 = vld [vmem:[%s181] sm:$0xff]
        %v226 = vld [vmem:[%s191] sm:$0xff]
        %v227 = vsub.f32 %v225, %v226
        %v228 = vmul.f32 %v227, %v227
        %v229 = vmul.f32 %v228, -0.0061728396
        %v230 = vmul.f32 %v229, 1.442695
        %v231 = vpow.pop %v230
        %v232 = vld [vmem:[%s217] sm:$0xff]
        %v233 = vadd.f32 %v231, 0.0
        %v234 = vadd.f32 %v232, %v233
        %235 = vst [vmem:[%s217] sm:$0xff] %v234
        %s236 = sand.u32 %s98, 1
        %s237 = scalar_lea.sflag [#allocation4], %s236
        %s238 = sand.u32 %s98, 1
        %s239 = smul.addr %s238, 8
        %s240 = scalar_lea.vmem [#allocation7], %s239
        // Predicated region
        $region41: #{tpu_custom_call.1} parent=27 // pred_check
          %p241 = pneg %p108
        $region42: #{tpu_custom_call.1} parent=27 // pred_check_branch
          %243 = sbr.rel (%p241) target = $region44
        $region43: #{tpu_custom_call.1} parent=27 // pred_region
          %245 = vsyncadd %s237, 0
          %s246 = smul.addr %s26, 8
          %s247 = scalar_lea.hbm %s2, %s246
          %s249 = sshll.u32 %s240, 4
          %s250 = int_to_ptr.vmem [resolvable:$true] %s249
          %s251 = sshll.u32 %s247, 4
          %s252 = int_to_ptr.hbm [resolvable:$true] %s251
          %254 = dma.vmem_to_hbm [thread:$0]  %s250, 128, %s252, %s237
        $region44: #{tpu_custom_call.1} parent=27 // pred_fallthru
          _
      $region28: #{tpu_custom_call.1} parent=5 // pred_fallthru
        _
      %p255 = scmp.le.s32.totalorder 2, %s17
      // Predicated region
      $region45: #{tpu_custom_call.1} parent=5 // pred_check
        %p256 = pneg %p255
      $region46: #{tpu_custom_call.1} parent=5 // pred_check_branch
        %258 = sbr.rel (%p256) target = $region48
      $region47: #{tpu_custom_call.1} parent=5 // pred_region
        %s259 = ssub.s32 %s17, 2
        // Predicated region
        $region49: #{tpu_custom_call.1} parent=47 // pred_check
          %p260 = pneg %p114
        $region50: #{tpu_custom_call.1} parent=47 // pred_check_branch
          %262 = sbr.rel (%p260) target = $region52
        $region51: #{tpu_custom_call.1} parent=47 // pred_region
          %s263 = sand.u32 %s99, 1
          %s264 = scalar_lea.sflag [#allocation4], %s263
          %s265 = sand.u32 %s99, 1
          %s266 = smul.addr %s265, 8
          %s267 = scalar_lea.vmem [#allocation7], %s266
          %269 = dma.done %s264, 128
        $region52: #{tpu_custom_call.1} parent=47 // pred_fallthru
          _
      $region48: #{tpu_custom_call.1} parent=5 // pred_fallthru
        _
    $region6: #{tpu_custom_call.1} parent=1 // loop_footer
      %s21 = sadd.s32 1, %s17
    $region7: #{tpu_custom_call.1} parent=1 // loop_footer_branch
      %16 = sbr.rel target = $region3
    $region8: #{tpu_custom_call.1} parent=1 // loop_exit
      _
    %270 = vsyncpa [#allocation3], 1
    %s271 = scalar_lea.sflag [#allocation3], 1
    %272 = vsyncpa %s271, 1
    %273 = vsyncpa [#allocation6], 1
    %s274 = scalar_lea.sflag [#allocation6], 1
    %275 = vsyncpa %s274, 1
    %276 = vsyncpa [#allocation4], 1
    %s277 = scalar_lea.sflag [#allocation4], 1
    %278 = vsyncpa %s277, 1

</llo_original>
